<compile_context>
chip_gen: v5e
topology: v5e:2x2
jax: 0.10.0
libtpu: 0.0.40
codegen_flags: <defaults>
</compile_context>

<pallas_src>
import functools

import jax
import jax.numpy as jnp
from jax.experimental import pallas as pl
from jax.experimental.pallas import tpu as pltpu

BN_EPS = 1e-5
C_IN, C_HID, C_OUT = 3, 4, 5


def _round_up(a, b):
    return ((a + b - 1) // b) * b


def _linear1_fma(x, w1, b1):
    # x: (3, T), w1: (4, 3), b1: (4, 1)  ->  h: (4, T), pure VPU broadcast-FMAs.
    h = b1 + w1[:, 0:1] * x[0:1, :]
    h = h + w1[:, 1:2] * x[1:2, :]
    h = h + w1[:, 2:3] * x[2:3, :]
    return h


def _stats_kernel(x_ref, w1_ref, b1_ref, sum_ref, sq_ref, *, n_valid, tile_n):
    """Pass 1: accumulate per-feature sum(h) and sum(h^2) over the batch."""
    i = pl.program_id(0)

    @pl.when(i == 0)
    def _():
        sum_ref[...] = jnp.zeros_like(sum_ref)
        sq_ref[...] = jnp.zeros_like(sq_ref)

    h = _linear1_fma(x_ref[...], w1_ref[...], b1_ref[...])          # (4, T)

    # Mask out padded batch columns so stats use exactly n_valid samples.
    col = jax.lax.broadcasted_iota(jnp.int32, (1, tile_n), 1) + i * tile_n
    valid = col < n_valid                                           # (1, T)
    hm = jnp.where(valid, h, 0.0)

    sum_ref[...] += jnp.sum(hm, axis=1, keepdims=True)              # (4, 1)
    sq_ref[...] += jnp.sum(hm * hm, axis=1, keepdims=True)          # (4, 1)


def _apply_kernel(x_ref, w1_ref, b1_ref, w2_ref, b2_ref, o_ref):
    """Pass 2: h = W1 x + b1, then folded (BN + linear2): out = W2' h + b2'."""
    h = _linear1_fma(x_ref[...], w1_ref[...], b1_ref[...])          # (4, T)
    w2 = w2_ref[...]                                                # (5, 4)
    out = b2_ref[...] + w2[:, 0:1] * h[0:1, :]
    out = out + w2[:, 1:2] * h[1:2, :]
    out = out + w2[:, 2:3] * h[2:3, :]
    out = out + w2[:, 3:4] * h[3:4, :]
    o_ref[...] = out.astype(o_ref.dtype)                            # (5, T)


def model_forward(x, params):
    """x: (N, 3) float32. Returns (N, 5) float32 (training-mode BN)."""
    w1, b1, gamma, beta, w2, b2 = params
    n = x.shape[0]

    # Batch tiling: lane-dense tiles (multiples of 128), up to 512 columns.
    tile_n = min(512, _round_up(n, 128))
    n_pad = _round_up(n, tile_n)
    grid_t = n_pad // tile_n

    # Feature-major (C, N) layout, zero-padded along the batch/lane axis.
    x_cm = jnp.zeros((C_IN, n_pad), jnp.float32).at[:, :n].set(
        x.astype(jnp.float32).T)
    w1f = w1.astype(jnp.float32)                 # (4, 3)
    b1c = b1.reshape(C_HID, 1).astype(jnp.float32)

    x_spec = pl.BlockSpec((C_IN, tile_n), lambda i: (0, i))
    w1_spec = pl.BlockSpec((C_HID, C_IN), lambda i: (0, 0))
    b1_spec = pl.BlockSpec((C_HID, 1), lambda i: (0, 0))
    acc_spec = pl.BlockSpec((C_HID, 1), lambda i: (0, 0))   # resident accumulator

    # ---- pass 1: batch statistics (single sweep: sum and sum-of-squares) ----
    sum_h, sumsq_h = pl.pallas_call(
        functools.partial(_stats_kernel, n_valid=n, tile_n=tile_n),
        grid=(grid_t,),
        in_specs=[x_spec, w1_spec, b1_spec],
        out_specs=(acc_spec, acc_spec),
        out_shape=(jax.ShapeDtypeStruct((C_HID, 1), jnp.float32),
                   jax.ShapeDtypeStruct((C_HID, 1), jnp.float32)),
        compiler_params=pltpu.CompilerParams(
            dimension_semantics=("arbitrary",)),
        cost_estimate=pl.CostEstimate(
            flops=48 * n_pad, transcendentals=0,
            bytes_accessed=4 * C_IN * n_pad + 128),
    )(x_cm, w1f, b1c)

    # ---- fold BN (batch stats, biased var) + affine into linear2 (O(20) flops) ----
    mean = sum_h / n                                        # (4, 1)
    var = jnp.maximum(sumsq_h / n - mean * mean, 0.0)       # biased var (PyTorch fwd)
    inv_std = jax.lax.rsqrt(var + BN_EPS)
    scale = gamma.reshape(C_HID, 1).astype(jnp.float32) * inv_std   # (4, 1)
    shift = beta.reshape(C_HID, 1).astype(jnp.float32) - mean * scale
    w2_eff = (w2.astype(jnp.float32) * scale.reshape(1, C_HID))     # (5, 4)
    b2_eff = (w2.astype(jnp.float32) @ shift
              + b2.reshape(C_OUT, 1).astype(jnp.float32))           # (5, 1)

    # ---- pass 2: apply (parallel over batch tiles, lane-dense (5, N) output) ----
    out_cm = pl.pallas_call(
        _apply_kernel,
        grid=(grid_t,),
        in_specs=[x_spec, w1_spec, b1_spec,
                  pl.BlockSpec((C_OUT, C_HID), lambda i: (0, 0)),
                  pl.BlockSpec((C_OUT, 1), lambda i: (0, 0))],
        out_specs=pl.BlockSpec((C_OUT, tile_n), lambda i: (0, i)),
        out_shape=jax.ShapeDtypeStruct((C_OUT, n_pad), jnp.float32),
        compiler_params=pltpu.CompilerParams(
            dimension_semantics=("parallel",)),
        cost_estimate=pl.CostEstimate(
            flops=70 * n_pad, transcendentals=0,
            bytes_accessed=4 * (C_IN + C_OUT) * n_pad + 256),
    )(x_cm, w1f, b1c, w2_eff, b2_eff)

    return out_cm[:, :n].T                                  # (N, 5)


def init_params(key):
    """Deterministic parameter init matching the PyTorch module's shapes."""
    k1, k2, k3, k4 = jax.random.split(key, 4)
    w1 = jax.random.uniform(k1, (C_HID, C_IN), jnp.float32, -0.5, 0.5)   # Linear(3,4)
    b1 = jax.random.uniform(k2, (C_HID,), jnp.float32, -0.5, 0.5)
    gamma = jnp.ones((C_HID,), jnp.float32)                              # BN affine defaults
    beta = jnp.zeros((C_HID,), jnp.float32)
    w2 = jax.random.uniform(k3, (C_OUT, C_HID), jnp.float32, -0.5, 0.5)  # Linear(4,5)
    b2 = jax.random.uniform(k4, (C_OUT,), jnp.float32, -0.5, 0.5)
    return (w1, b1, gamma, beta, w2, b2)


def _reference(x, params):
    w1, b1, gamma, beta, w2, b2 = params
    h = x @ w1.T + b1
    mean = h.mean(axis=0, keepdims=True)
    var = ((h - mean) ** 2).mean(axis=0, keepdims=True)  # biased var (PyTorch BN fwd)
    h = (h - mean) / jnp.sqrt(var + BN_EPS) * gamma + beta
    return h @ w2.T + b2


if __name__ == "__main__":
    key = jax.random.PRNGKey(0)
    kx, kp = jax.random.split(key)
    batch = 8
    x = jax.random.normal(kx, (batch, C_IN), jnp.float32)
    params = init_params(kp)

    out = jax.block_until_ready(model_forward(x, params))

    ref = _reference(x, params)
    assert out.shape == (batch, C_OUT)
    assert jnp.allclose(out, ref, atol=1e-4, rtol=1e-4), "mismatch vs reference"
    print("KERNEL_OK")
</pallas_src>

<mosaic_0001>
module attributes {stable_mosaic.version = 11 : i64} {
  func.func @_stats_kernel(%arg0: i32, %arg1: memref<3x128xf32, #tpu.memory_space<vmem>>, %arg2: memref<4x3xf32, #tpu.memory_space<vmem>>, %arg3: memref<4x1xf32, #tpu.memory_space<vmem>>, %arg4: memref<4x1xf32, #tpu.memory_space<vmem>>, %arg5: memref<4x1xf32, #tpu.memory_space<vmem>>) attributes {dimension_semantics = [#tpu.dimension_semantics<arbitrary>], iteration_bounds = array<i64: 1>, scalar_prefetch = 0 : i64, scratch_operands = 0 : i64, tpu.core_type = #tpu.core_type<tc>, window_params = [{transform_indices = @transform_0, window_bounds = array<i64: 3, 128>}, {pipeline_mode = #tpu.pipeline_mode<synchronous>, transform_indices = @transform_1, window_bounds = array<i64: 4, 3>}, {pipeline_mode = #tpu.pipeline_mode<synchronous>, transform_indices = @transform_2, window_bounds = array<i64: 4, 1>}, {pipeline_mode = #tpu.pipeline_mode<synchronous>, transform_indices = @transform_3, window_bounds = array<i64: 4, 1>}, {pipeline_mode = #tpu.pipeline_mode<synchronous>, transform_indices = @transform_4, window_bounds = array<i64: 4, 1>}]} {
    %c0_i32 = arith.constant 0 : i32
    %0 = arith.cmpi eq, %arg0, %c0_i32 : i32
    %1 = arith.extui %0 : i1 to i32
    %c0_i32_0 = arith.constant 0 : i32
    %2 = arith.cmpi ne, %1, %c0_i32_0 : i32
    scf.if %2 {
      %cst_16 = arith.constant 0.000000e+00 : f32
      %46 = vector.broadcast %cst_16 : f32 to vector<4x1xf32>
      %c0_17 = arith.constant 0 : index
      %c0_18 = arith.constant 0 : index
      %47 = vector.load %arg4[%c0_17, %c0_18] : memref<4x1xf32, #tpu.memory_space<vmem>>, vector<4x1xf32>
      tpu.vector_store %arg4[%c0_17, %c0_18], %46 {strides = array<i32>} : memref<4x1xf32, #tpu.memory_space<vmem>>, vector<4x1xf32>,
      %cst_19 = arith.constant 0.000000e+00 : f32
      %48 = vector.broadcast %cst_19 : f32 to vector<4x1xf32>
      %c0_20 = arith.constant 0 : index
      %c0_21 = arith.constant 0 : index
      %49 = vector.load %arg5[%c0_20, %c0_21] : memref<4x1xf32, #tpu.memory_space<vmem>>, vector<4x1xf32>
      tpu.vector_store %arg5[%c0_20, %c0_21], %48 {strides = array<i32>} : memref<4x1xf32, #tpu.memory_space<vmem>>, vector<4x1xf32>,
    } else {
    }
    %c0 = arith.constant 0 : index
    %c0_1 = arith.constant 0 : index
    %3 = vector.load %arg1[%c0, %c0_1] : memref<3x128xf32, #tpu.memory_space<vmem>>, vector<3x128xf32>
    %c0_2 = arith.constant 0 : index
    %c0_3 = arith.constant 0 : index
    %4 = vector.load %arg2[%c0_2, %c0_3] : memref<4x3xf32, #tpu.memory_space<vmem>>, vector<4x3xf32>
    %c0_4 = arith.constant 0 : index
    %c0_5 = arith.constant 0 : index
    %5 = vector.load %arg3[%c0_4, %c0_5] : memref<4x1xf32, #tpu.memory_space<vmem>>, vector<4x1xf32>
    %6 = vector.extract_strided_slice %4 {offsets = [0, 0], sizes = [4, 1], strides = [1, 1]} : vector<4x3xf32> to vector<4x1xf32>
    %7 = vector.extract_strided_slice %3 {offsets = [0, 0], sizes = [1, 128], strides = [1, 1]} : vector<3x128xf32> to vector<1x128xf32>
    %8 = vector.broadcast %6 : vector<4x1xf32> to vector<4x128xf32>
    %9 = vector.broadcast %7 : vector<1x128xf32> to vector<4x128xf32>
    %10 = arith.mulf %8, %9 : vector<4x128xf32>
    %11 = vector.broadcast %5 : vector<4x1xf32> to vector<4x128xf32>
    %12 = arith.addf %11, %10 : vector<4x128xf32>
    %13 = vector.extract_strided_slice %4 {offsets = [0, 1], sizes = [4, 1], strides = [1, 1]} : vector<4x3xf32> to vector<4x1xf32>
    %14 = vector.extract_strided_slice %3 {offsets = [1, 0], sizes = [1, 128], strides = [1, 1]} : vector<3x128xf32> to vector<1x128xf32>
    %15 = vector.broadcast %13 : vector<4x1xf32> to vector<4x128xf32>
    %16 = vector.broadcast %14 : vector<1x128xf32> to vector<4x128xf32>
    %17 = arith.mulf %15, %16 : vector<4x128xf32>
    %18 = arith.addf %12, %17 : vector<4x128xf32>
    %19 = vector.extract_strided_slice %4 {offsets = [0, 2], sizes = [4, 1], strides = [1, 1]} : vector<4x3xf32> to vector<4x1xf32>
    %20 = vector.extract_strided_slice %3 {offsets = [2, 0], sizes = [1, 128], strides = [1, 1]} : vector<3x128xf32> to vector<1x128xf32>
    %21 = vector.broadcast %19 : vector<4x1xf32> to vector<4x128xf32>
    %22 = vector.broadcast %20 : vector<1x128xf32> to vector<4x128xf32>
    %23 = arith.mulf %21, %22 : vector<4x128xf32>
    %24 = arith.addf %18, %23 : vector<4x128xf32>
    %25 = tpu.iota {dimensions = array<i32: 1>} : vector<1x128xi32>
    %c128_i32 = arith.constant 128 : i32
    %26 = arith.muli %arg0, %c128_i32 : i32
    %27 = vector.broadcast %26 : i32 to vector<1x128xi32>
    %28 = arith.addi %25, %27 : vector<1x128xi32>
    %c8_i32 = arith.constant 8 : i32
    %29 = vector.broadcast %c8_i32 : i32 to vector<1x128xi32>
    %30 = arith.cmpi slt, %28, %29 : vector<1x128xi32>
    %cst = arith.constant 0.000000e+00 : f32
    %31 = vector.shape_cast %30 : vector<1x128xi1> to vector<1x128xi1>
    %32 = vector.broadcast %31 : vector<1x128xi1> to vector<4x128xi1>
    %33 = vector.broadcast %cst : f32 to vector<4x128xf32>
    %34 = arith.select %32, %24, %33 : vector<4x128xi1>, vector<4x128xf32>
    %c0_6 = arith.constant 0 : index
    %c0_7 = arith.constant 0 : index
    %35 = vector.load %arg4[%c0_6, %c0_7] : memref<4x1xf32, #tpu.memory_space<vmem>>, vector<4x1xf32>
    %cst_8 = arith.constant dense<0.000000e+00> : vector<4xf32>
    %36 = vector.multi_reduction <add>, %34, %cst_8 [1] : vector<4x128xf32> to vector<4xf32>
    %37 = vector.shape_cast %36 : vector<4xf32> to vector<4x1xf32>
    %38 = arith.addf %35, %37 : vector<4x1xf32>
    %c0_9 = arith.constant 0 : index
    %c0_10 = arith.constant 0 : index
    %39 = vector.load %arg4[%c0_9, %c0_10] : memref<4x1xf32, #tpu.memory_space<vmem>>, vector<4x1xf32>
    tpu.vector_store %arg4[%c0_9, %c0_10], %38 {strides = array<i32>} : memref<4x1xf32, #tpu.memory_space<vmem>>, vector<4x1xf32>,
    %c0_11 = arith.constant 0 : index
    %c0_12 = arith.constant 0 : index
    %40 = vector.load %arg5[%c0_11, %c0_12] : memref<4x1xf32, #tpu.memory_space<vmem>>, vector<4x1xf32>
    %41 = arith.mulf %34, %34 : vector<4x128xf32>
    %cst_13 = arith.constant dense<0.000000e+00> : vector<4xf32>
    %42 = vector.multi_reduction <add>, %41, %cst_13 [1] : vector<4x128xf32> to vector<4xf32>
    %43 = vector.shape_cast %42 : vector<4xf32> to vector<4x1xf32>
    %44 = arith.addf %40, %43 : vector<4x1xf32>
    %c0_14 = arith.constant 0 : index
    %c0_15 = arith.constant 0 : index
    %45 = vector.load %arg5[%c0_14, %c0_15] : memref<4x1xf32, #tpu.memory_space<vmem>>, vector<4x1xf32>
    tpu.vector_store %arg5[%c0_14, %c0_15], %44 {strides = array<i32>} : memref<4x1xf32, #tpu.memory_space<vmem>>, vector<4x1xf32>,
    return
  }
  func.func @transform_0(%arg0: i32) -> (i32, i32) {
    %c0_i32 = arith.constant 0 : i32
    %c0_i32_0 = arith.constant 0 : i32
    return %c0_i32, %arg0 : i32, i32
  }
  func.func @transform_1(%arg0: i32) -> (i32, i32) {
    %c0_i32 = arith.constant 0 : i32
    %c0_i32_0 = arith.constant 0 : i32
    %c0_i32_1 = arith.constant 0 : i32
    return %c0_i32, %c0_i32_0 : i32, i32
  }
  func.func @transform_2(%arg0: i32) -> (i32, i32) {
    %c0_i32 = arith.constant 0 : i32
    %c0_i32_0 = arith.constant 0 : i32
    %c0_i32_1 = arith.constant 0 : i32
    return %c0_i32, %c0_i32_0 : i32, i32
  }
  func.func @transform_3(%arg0: i32) -> (i32, i32) {
    %c0_i32 = arith.constant 0 : i32
    %c0_i32_0 = arith.constant 0 : i32
    %c0_i32_1 = arith.constant 0 : i32
    return %c0_i32, %c0_i32_0 : i32, i32
  }
  func.func @transform_4(%arg0: i32) -> (i32, i32) {
    %c0_i32 = arith.constant 0 : i32
    %c0_i32_0 = arith.constant 0 : i32
    %c0_i32_1 = arith.constant 0 : i32
    return %c0_i32, %c0_i32_0 : i32, i32
  }
}

</mosaic_0001>

<llo_original>
// kernel: tpu_custom_call.1
$region0: #{tpu_custom_call.1}
  #allocation0 [shape = 'u32[]', space=smem, size = 0x4, offset = 0x4, fixed_abs, tag = 'smem constant byte address 0x4 - core index']
  #allocation1 [shape = 'u32[72,128]{1,0:T(1,128)}', space=vmem, size = 0x9000, scoped, tag = 'internal scratch']
  %s0 = inlined_call_operand.vmem [shape: f32[3,128], index: 0, kind: input, shape index: {}]
  %s1 = inlined_call_operand.hbm [shape: f32[4,3], index: 1, kind: input, shape index: {}]
  %s2 = inlined_call_operand.vmem [shape: f32[4,1], index: 2, kind: input, shape index: {}]
  %s3 = inlined_call_operand.vmem [shape: f32[4,1], index: 3, kind: output, shape index: {0}]
  %s4 = inlined_call_operand.vmem [shape: f32[4,1], index: 4, kind: output, shape index: {1}]
  %5 = xla_tuple %s3, %s4
  %s6 = sld [smem:[#allocation0]]
  $region38: #{tpu_custom_call.1} parent=0
    _
  %s8 = ssub.s32 1, %s6
  %s9 = scalar_select 0, %s8, %s6
  $region1: #{tpu_custom_call.1} parent=0
    #allocation2 [shape = 'u8[2048]{0}', space=vmem, size = 0x800, scoped, tag = 'input window, operand 1, single buffered']
    #allocation3 [shape = 's32[1]{0}', space=sflag, size = 0x4, scoped, tag = 'scoped memory for tpu_custom_call.1']
    %10 = vsyncpa [#allocation3], 0
    // Predicated region
    $region2: #{tpu_custom_call.1} parent=1 // pred_check
      _
    $region3: #{tpu_custom_call.1} parent=1 // pred_check_branch
      %12 = sbr.rel (0) target = $region5
    $region4: #{tpu_custom_call.1} parent=1 // pred_region
      _
    $region5: #{tpu_custom_call.1} parent=1 // pred_fallthru
      _
    // Predicated region
    $region6: #{tpu_custom_call.1} parent=1 // pred_check
      _
    $region7: #{tpu_custom_call.1} parent=1 // pred_check_branch
      %14 = sbr.rel (0) target = $region9
    $region8: #{tpu_custom_call.1} parent=1 // pred_region
      %16 = vsyncadd [#allocation3], 0
      %s18 = sshll.u32 %s1, 4
      %s19 = int_to_ptr.hbm [resolvable:$true] %s18
      %s20 = sshll.u32 [#allocation2], 4
      %s21 = int_to_ptr.vmem [resolvable:$true] %s20
      %23 = dma.hbm_to_vmem [thread:$0]  %s19, 64, %s21, [#allocation3]
    $region9: #{tpu_custom_call.1} parent=1 // pred_fallthru
      _
    // Predicated region
    $region10: #{tpu_custom_call.1} parent=1 // pred_check
      _
    $region11: #{tpu_custom_call.1} parent=1 // pred_check_branch
      %25 = sbr.rel (0) target = $region13
    $region12: #{tpu_custom_call.1} parent=1 // pred_region
      _
    $region13: #{tpu_custom_call.1} parent=1 // pred_fallthru
      _
    // Predicated region
    $region14: #{tpu_custom_call.1} parent=1 // pred_check
      _
    $region15: #{tpu_custom_call.1} parent=1 // pred_check_branch
      %27 = sbr.rel (0) target = $region17
    $region16: #{tpu_custom_call.1} parent=1 // pred_region
      %29 = dma.done [#allocation3], 64
    $region17: #{tpu_custom_call.1} parent=1 // pred_fallthru
      _
    %p30 = scmp.eq.s32.totalorder 0, 0
    // Predicated region
    $region18: #{tpu_custom_call.1} parent=1 // pred_check
      %p31 = pneg %p30
    $region19: #{tpu_custom_call.1} parent=1 // pred_check_branch
      %33 = sbr.rel (%p31) target = $region21
    $region20: #{tpu_custom_call.1} parent=1 // pred_region
      %vm34 = vcmask 3072
      %35 = vst.msk [vmem:[%s3] sm:$0xf] %vm34, 0.0
      %36 = vst.msk [vmem:[%s4] sm:$0xf] %vm34, 0.0
    $region21: #{tpu_custom_call.1} parent=1 // pred_fallthru
      _
    %v37 = vld [vmem:[%s0] sm:$0x7]
    %v38 = vld [vmem:[#allocation2] sm:$0xf]
    %v39 = vld [vmem:[%s2] sm:$0xf]
    %41 = vset.pattern.permute.xlu0 0
    %42 = vperm.xlu0 %41, %v38
    %v43 = vpop.permute.xlu0 %42
    %v45 = vperm.slane %v37, 0
    %v46 = vmul.f32 %v43, %v45
    %48 = vset.pattern.permute.xlu0 0
    %49 = vperm.xlu0 %48, %v39
    %v50 = vpop.permute.xlu0 %49
    %v52 = vadd.f32 %v50, %v46
    %53 = vset.pattern.permute.xlu0 1
    %54 = vperm.xlu0 %53, %v38
    %v55 = vpop.permute.xlu0 %54
    %v57 = vperm.slane %v37, 1
    %v58 = vmul.f32 %v55, %v57
    %v59 = vadd.f32 %v52, %v58
    %60 = vset.pattern.permute.xlu0 2
    %61 = vperm.xlu0 %60, %v38
    %v62 = vpop.permute.xlu0 %61
    %v64 = vperm.slane %v37, 2
    %v65 = vmul.f32 %v62, %v64
    %v66 = vadd.f32 %v59, %v65
    %v67 = vlaneseq
    %v68 = vand.u32 %v67, 127
    %s69 = smul.u32 0, 128
    %v70 = vstv %s69
    %v71 = vadd.s32 %v68, %v70
    %vm72 = vcmp.lt.s32.totalorder %v71, 8
    %v73 = vsel %vm72, 1, 0
    %vm74 = vcmp.eq.s32.totalorder %v73, 1
    %v75 = vsel %vm74, %v66, 0.0
    %v76 = vld [vmem:[%s3] sm:$0xf]
    %vm77 = vcmask 1043456
    %v78 = vsel %vm77, %v75, 0.0
    %79 = vadd.xlane.f32.xlu0 %v78
    %v80 = vpop.xlane.xlu0 %79
    %v81 = vadd.f32 %v76, %v80
    %vm82 = vcmask 3072
    %83 = vst.msk [vmem:[%s3] sm:$0xf] %vm82, %v81
    %v84 = vld [vmem:[%s4] sm:$0xf]
    %v85 = vmul.f32 %v75, %v75
    %v86 = vsel %vm77, %v85, 0.0
    %87 = vadd.xlane.f32.xlu0 %v86
    %v88 = vpop.xlane.xlu0 %87
    %v89 = vadd.f32 %v84, %v88
    %90 = vst.msk [vmem:[%s4] sm:$0xf] %vm82, %v89
    // Predicated region
    $region22: #{tpu_custom_call.1} parent=1 // pred_check
      _
    $region23: #{tpu_custom_call.1} parent=1 // pred_check_branch
      %92 = sbr.rel (0) target = $region25
    $region24: #{tpu_custom_call.1} parent=1 // pred_region
      _
    $region25: #{tpu_custom_call.1} parent=1 // pred_fallthru
      _
    // Predicated region
    $region26: #{tpu_custom_call.1} parent=1 // pred_check
      _
    $region27: #{tpu_custom_call.1} parent=1 // pred_check_branch
      %94 = sbr.rel (0) target = $region29
    $region28: #{tpu_custom_call.1} parent=1 // pred_region
      _
    $region29: #{tpu_custom_call.1} parent=1 // pred_fallthru
      _
    // Predicated region
    $region30: #{tpu_custom_call.1} parent=1 // pred_check
      _
    $region31: #{tpu_custom_call.1} parent=1 // pred_check_branch
      %96 = sbr.rel (0) target = $region33
    $region32: #{tpu_custom_call.1} parent=1 // pred_region
      _
    $region33: #{tpu_custom_call.1} parent=1 // pred_fallthru
      _
    // Predicated region
    $region34: #{tpu_custom_call.1} parent=1 // pred_check
      _
    $region35: #{tpu_custom_call.1} parent=1 // pred_check_branch
      %98 = sbr.rel (0) target = $region37
    $region36: #{tpu_custom_call.1} parent=1 // pred_region
      _
    $region37: #{tpu_custom_call.1} parent=1 // pred_fallthru
      _
    %99 = vsyncpa [#allocation3], 1

</llo_original>
